<compile_context>
chip_gen: v7x
topology: tpu7x:2x2x1
jax: 0.10.0
libtpu: 0.0.40
codegen_flags: <defaults>
</compile_context>

<pallas_src>
import jax
import jax.numpy as jnp
from jax import lax
from jax.experimental import pallas as pl
from jax.experimental.pallas import tpu as pltpu

EPS = 1e-5   # torch.nn.InstanceNorm2d default eps


# ----------------------------------------------------------------------------
# chip-adaptive tiling / VMEM budget
# ----------------------------------------------------------------------------
def _tpu_vmem_bytes():
    try:
        return int(pltpu.get_tpu_info().vmem_capacity_bytes)
    except Exception:
        return 64 * 1024 * 1024   # conservative (v7x per-core)


_VMEM_CAP = _tpu_vmem_bytes()
_VMEM_LIMIT = int(_VMEM_CAP * 3 // 4)                 # ~48 MiB v7x, ~96 MiB v5e/v6e
_TILE_TARGET = 4096 if _VMEM_CAP <= (64 << 20) else 8192


def _pick_tile_h(Ho, Wo, target_elems):
    """Largest divisor of Ho with tile_h * Wo <= target; >= 2 tiles when Ho >= 8."""
    cap = Ho if Ho < 8 else max(1, Ho // 2)
    best = 1
    for d in range(1, cap + 1):
        if Ho % d == 0 and d * Wo <= target_elems:
            best = d
    return best


# ----------------------------------------------------------------------------
# Pallas kernel 1: fused stride-1 VALID conv on a pre-padded bf16 image
#   - taps folded into the contraction dim when the per-tap depth is shallow
#   - optional bias / activation
#   - optional per-(image, channel) sum / sum-of-squares accumulation
# ----------------------------------------------------------------------------
def _make_conv_kernel(K, tile_h, Wo, Cin, Cout, *, fold, emit_stats, add_bias,
                      act, compute_dtype):
    M = tile_h * Wo

    def kernel(*refs):
        i = 0
        x_ref = refs[i]; i += 1                     # (Hp, Wp, Cin) resident image
        w_ref = refs[i]; i += 1                     # weights (layout depends on fold)
        b_ref = None
        if add_bias:
            b_ref = refs[i]; i += 1                 # (1, Cout) f32
        y_ref = refs[i]; i += 1                     # (tile_h, Wo, Cout)
        st_ref = refs[i] if emit_stats else None    # (2, Cout) f32, revisited over t

        t = pl.program_id(1)
        row0 = t * tile_h

        def load_row(kh):
            xr = x_ref[pl.ds(row0 + kh, tile_h), :, :]        # (tile_h, Wp, Cin)
            return xr.astype(compute_dtype)                   # no-op when already bf16

        if fold == "all":
            pieces = []
            for kh in range(K):
                xr = load_row(kh)
                pieces.extend(xr[:, kw:kw + Wo, :] for kw in range(K))
            xt = jnp.concatenate(pieces, axis=-1).reshape(M, K * K * Cin)
            acc = jnp.dot(xt, w_ref[...], preferred_element_type=jnp.float32)
        elif fold == "kw":
            acc = jnp.zeros((M, Cout), jnp.float32)
            for kh in range(K):
                xr = load_row(kh)
                xt = jnp.concatenate([xr[:, kw:kw + Wo, :] for kw in range(K)],
                                     axis=-1).reshape(M, K * Cin)
                acc = acc + jnp.dot(xt, w_ref[kh],
                                    preferred_element_type=jnp.float32)
        else:  # "none": per-tap loop (Cin already fills the MXU depth)
            acc = jnp.zeros((M, Cout), jnp.float32)
            for kh in range(K):
                xr = load_row(kh)
                for kw in range(K):
                    xt = xr[:, kw:kw + Wo, :].reshape(M, Cin)
                    acc = acc + jnp.dot(xt, w_ref[kh * K + kw],
                                        preferred_element_type=jnp.float32)

        y = acc
        if add_bias:
            y = y + b_ref[...]
        if act == "relu":
            y = jnp.maximum(y, 0.0)
        elif act == "tanh":
            y = jnp.tanh(y)

        y_ref[...] = y.reshape(tile_h, Wo, Cout).astype(y_ref.dtype)

        if emit_stats:
            s = jnp.sum(y, axis=0, keepdims=True)             # (1, Cout) f32
            ss = jnp.sum(y * y, axis=0, keepdims=True)

            @pl.when(t == 0)
            def _init():
                st_ref[0:1, :] = s
                st_ref[1:2, :] = ss

            @pl.when(t > 0)
            def _accum():
                st_ref[0:1, :] += s
                st_ref[1:2, :] += ss

    return kernel


def fused_conv(x_p, w_hwio, *, bias=None, act="none", emit_stats=True,
               compute_dtype=jnp.bfloat16, out_dtype=jnp.bfloat16):
    """Stride-1 VALID conv on a pre-padded NHWC input.

    x_p: (N, Hp, Wp, Cin) bf16/f32;  w_hwio: (K, K, Cin, Cout).
    Returns (y, stats) with y (N, Ho, Wo, Cout) and stats (N, 2, Cout) f32
    (= [sum, sumsq] over spatial), or stats=None when emit_stats is False.
    """
    N, Hp, Wp, Cin = x_p.shape
    K = w_hwio.shape[0]
    Cout = w_hwio.shape[-1]
    assert w_hwio.shape[2] == Cin
    Ho, Wo = Hp - K + 1, Wp - K + 1
    tile_h = _pick_tile_h(Ho, Wo, _TILE_TARGET)
    T = Ho // tile_h

    # MXU-depth heuristic: fold taps into the contraction when Cin is shallow.
    if Cin < 128:
        fold = "all" if K * K * Cin <= 512 else "kw"
    else:
        fold = "none"

    if fold == "all":
        w_mat = w_hwio.reshape(K * K * Cin, Cout).astype(compute_dtype)
        w_spec = pl.BlockSpec((K * K * Cin, Cout), lambda n, t: (0, 0))
    elif fold == "kw":
        w_mat = w_hwio.reshape(K, K * Cin, Cout).astype(compute_dtype)
        w_spec = pl.BlockSpec((K, K * Cin, Cout), lambda n, t: (0, 0, 0))
    else:
        w_mat = w_hwio.reshape(K * K, Cin, Cout).astype(compute_dtype)
        w_spec = pl.BlockSpec((K * K, Cin, Cout), lambda n, t: (0, 0, 0))

    in_specs = [
        pl.BlockSpec((None, Hp, Wp, Cin), lambda n, t: (n, 0, 0, 0)),  # resident image
        w_spec,                                                        # VMEM weights
    ]
    args = [x_p, w_mat]
    if bias is not None:
        in_specs.append(pl.BlockSpec((1, Cout), lambda n, t: (0, 0)))
        args.append(bias.reshape(1, Cout).astype(jnp.float32))

    out_shape = [jax.ShapeDtypeStruct((N, Ho, Wo, Cout), out_dtype)]
    out_specs = [pl.BlockSpec((None, tile_h, Wo, Cout), lambda n, t: (n, t, 0, 0))]
    if emit_stats:
        out_shape.append(jax.ShapeDtypeStruct((N, 2, Cout), jnp.float32))
        out_specs.append(pl.BlockSpec((None, 2, Cout), lambda n, t: (n, 0, 0)))

    dims = ("parallel", "arbitrary") if emit_stats else ("parallel", "parallel")
    kernel = _make_conv_kernel(K, tile_h, Wo, Cin, Cout, fold=fold,
                               emit_stats=emit_stats, add_bias=bias is not None,
                               act=act, compute_dtype=compute_dtype)
    result = pl.pallas_call(
        kernel,
        out_shape=tuple(out_shape),
        grid=(N, T),
        in_specs=in_specs,
        out_specs=tuple(out_specs),
        compiler_params=pltpu.CompilerParams(
            dimension_semantics=dims, vmem_limit_bytes=_VMEM_LIMIT),
    )(*args)
    if emit_stats:
        return result[0], result[1]
    return result[0], None


# ----------------------------------------------------------------------------
# Pallas kernel 2: InstanceNorm apply (+residual) (+ReLU), writing the
#                  reflect / zero PRE-PADDED input of the next conv (fused pad).
# ----------------------------------------------------------------------------
def _make_norm_pad_kernel(H, W, C, pads, mode, has_res, res_off, act, chunk_h):
    (ph_lo, ph_hi), (pw_lo, pw_hi) = pads
    Hout = H + ph_lo + ph_hi
    Wout = W + pw_lo + pw_hi
    inv_hw = 1.0 / float(H * W)
    r_lo, c_lo = res_off

    def kernel(*refs):
        if has_res:
            y_ref, st_ref, r_ref, o_ref = refs
        else:
            y_ref, st_ref, o_ref = refs

        mean = st_ref[0:1, :] * inv_hw                       # (1, C) f32
        var = st_ref[1:2, :] * inv_hw - mean * mean
        rstd = lax.rsqrt(jnp.maximum(var, 0.0) + EPS)
        mean3 = mean.reshape(1, 1, C)
        rstd3 = rstd.reshape(1, 1, C)

        if mode == "zero" and (ph_lo or ph_hi or pw_lo or pw_hi):
            o_ref[...] = jnp.zeros((Hout, Wout, C), o_ref.dtype)

        # interior (and, for reflect, the left/right column halo), in row chunks
        for r0 in range(0, H, chunk_h):
            ch = min(chunk_h, H - r0)
            yt = y_ref[r0:r0 + ch, :, :].astype(jnp.float32)
            xn = (yt - mean3) * rstd3
            if has_res:
                rt = r_ref[r_lo + r0:r_lo + r0 + ch, c_lo:c_lo + W, :]
                xn = xn + rt.astype(jnp.float32)
            if act == "relu":
                xn = jnp.maximum(xn, 0.0)
            xn = xn.astype(o_ref.dtype)
            o_ref[ph_lo + r0:ph_lo + r0 + ch, pw_lo:pw_lo + W, :] = xn
            if mode == "reflect":
                for j in range(1, pw_lo + 1):
                    o_ref[ph_lo + r0:ph_lo + r0 + ch, pw_lo - j, :] = xn[:, j, :]
                for j in range(1, pw_hi + 1):
                    o_ref[ph_lo + r0:ph_lo + r0 + ch, pw_lo + W - 1 + j, :] = \
                        xn[:, W - 1 - j, :]

        # top / bottom reflected rows (full width, halo columns included)
        if mode == "reflect":
            for i in range(1, ph_lo + 1):
                o_ref[ph_lo - i, :, :] = o_ref[ph_lo + i, :, :]
            for i in range(1, ph_hi + 1):
                o_ref[ph_lo + H - 1 + i, :, :] = o_ref[ph_lo + H - 1 - i, :, :]

    return kernel


def norm_pad_act(y, stats, *, pad, mode, residual=None, res_pad=0, act="relu",
                 out_dtype=jnp.bfloat16):
    """InstanceNorm(y; stats) [+residual] [+ReLU] and write it pre-padded.

    y: (N, H, W, C);  stats: (N, 2, C) = [sum, sumsq] over spatial.
    pad: int or ((plo_h, phi_h), (plo_w, phi_w));  mode: 'reflect' | 'zero'.
    residual (optional): the padded previous activation; its interior (offset by
    res_pad) is added after normalization.
    """
    N, H, W, C = y.shape
    pads = ((pad, pad), (pad, pad)) if isinstance(pad, int) else pad
    Hout = H + pads[0][0] + pads[0][1]
    Wout = W + pads[1][0] + pads[1][1]
    chunk_h = max(1, min(H, _TILE_TARGET // max(W, 1)))

    in_specs = [
        pl.BlockSpec((None, H, W, C), lambda n: (n, 0, 0, 0)),
        pl.BlockSpec((None, 2, C), lambda n: (n, 0, 0)),
    ]
    args = [y, stats]
    has_res = residual is not None
    if has_res:
        Hr, Wr = residual.shape[1], residual.shape[2]
        in_specs.append(pl.BlockSpec((None, Hr, Wr, C), lambda n: (n, 0, 0, 0)))
        args.append(residual)

    kernel = _make_norm_pad_kernel(H, W, C, pads, mode, has_res,
                                   (res_pad, res_pad), act, chunk_h)
    return pl.pallas_call(
        kernel,
        out_shape=jax.ShapeDtypeStruct((N, Hout, Wout, C), out_dtype),
        grid=(N,),
        in_specs=in_specs,
        out_specs=pl.BlockSpec((None, Hout, Wout, C), lambda n: (n, 0, 0, 0)),
        compiler_params=pltpu.CompilerParams(
            dimension_semantics=("parallel",),
            vmem_limit_bytes=_VMEM_LIMIT),
    )(*args)


# ----------------------------------------------------------------------------
# JAX glue: padding of the network input, space<->depth, weight-layout transforms
# ----------------------------------------------------------------------------
def _pad_reflect(x, p):
    return jnp.pad(x, ((0, 0), (p, p), (p, p), (0, 0)), mode="reflect")


def _s2d(x):
    """Space-to-depth(2); channel order (ph, pw, c)."""
    N, H, W, C = x.shape
    x = x.reshape(N, H // 2, 2, W // 2, 2, C)
    x = jnp.transpose(x, (0, 1, 3, 2, 4, 5))
    return x.reshape(N, H // 2, W // 2, 4 * C)


def _d2s(y):
    """Depth-to-space(2); channel order (ph, pw, c)."""
    N, H, W, C4 = y.shape
    C = C4 // 4
    y = y.reshape(N, H, W, 2, 2, C)
    y = jnp.transpose(y, (0, 1, 3, 2, 4, 5))
    return y.reshape(N, 2 * H, 2 * W, C)


def _conv_w_hwio(w_oihw):
    """PyTorch Conv2d weight (Cout, Cin, K, K) -> (K, K, Cin, Cout)."""
    return jnp.transpose(w_oihw, (2, 3, 1, 0))


def _strided_conv_weight(w_oihw):
    """3x3 stride-2 conv -> stride-1 K=2 conv on space-to-depth(zero-pad-1) input."""
    w = _conv_w_hwio(w_oihw)                       # (3, 3, Cin, Cout)
    K, _, Cin, Cout = w.shape
    wq = jnp.zeros((2, 2, 2, 2, Cin, Cout), w.dtype)   # (qh, qw, ph, pw, ci, co)
    for qh in range(2):
        for qw in range(2):
            for ph in range(2):
                for pw in range(2):
                    kh, kw = 2 * qh + ph, 2 * qw + pw
                    if kh < K and kw < K:
                        wq = wq.at[qh, qw, ph, pw].set(w[kh, kw])
    return wq.reshape(2, 2, 4 * Cin, Cout)


def _convT_phase_weight(w_iohw):
    """ConvTranspose2d(K=3, s=2, p=1, op=1) weight (Cin, Cout, 3, 3) ->
    stride-1 K=2 weight (2, 2, Cin, 4*Cout) producing phase-packed output."""
    Cin, Cout, K, _ = w_iohw.shape
    wq = jnp.zeros((2, 2, Cin, 2, 2, Cout), w_iohw.dtype)  # (qh, qw, ci, ph, pw, co)
    for qh in range(2):
        for qw in range(2):
            for ph in range(2):
                for pw in range(2):
                    kh = ph + 1 - 2 * qh
                    kw = pw + 1 - 2 * qw
                    if 0 <= kh < K and 0 <= kw < K:
                        wq = wq.at[qh, qw, :, ph, pw, :].set(w_iohw[:, :, kh, kw])
    return wq.reshape(2, 2, Cin, 4 * Cout)


# ----------------------------------------------------------------------------
# ResNet-9blocks generator (define_G: 'resnet_9blocks', instance norm,
# no dropout, init_type='normal', init_gain=0.02)
# ----------------------------------------------------------------------------
def init_resnet_generator(key, input_nc=3, output_nc=3, ngf=64, n_blocks=9,
                          init_gain=0.02):
    def conv_p(k, cout, cin, kk):
        return (init_gain * jax.random.normal(k, (cout, cin, kk, kk), jnp.float32),
                jnp.zeros((cout,), jnp.float32))

    def convt_p(k, cin, cout, kk):
        return (init_gain * jax.random.normal(k, (cin, cout, kk, kk), jnp.float32),
                jnp.zeros((cout,), jnp.float32))

    keys = iter(jax.random.split(key, 8 + 2 * n_blocks))
    return {
        "c_in": conv_p(next(keys), ngf, input_nc, 7),
        "down1": conv_p(next(keys), ngf * 2, ngf, 3),
        "down2": conv_p(next(keys), ngf * 4, ngf * 2, 3),
        "blocks": [(conv_p(next(keys), ngf * 4, ngf * 4, 3),
                    conv_p(next(keys), ngf * 4, ngf * 4, 3))
                   for _ in range(n_blocks)],
        "up1": convt_p(next(keys), ngf * 4, ngf * 2, 3),
        "up2": convt_p(next(keys), ngf * 2, ngf, 3),
        "c_out": conv_p(next(keys), output_nc, ngf, 7),
    }


def resnet_generator(params, x, *, compute_dtype=jnp.bfloat16,
                     act_dtype=jnp.bfloat16):
    """x: (N, H, W, 3) -> (N, H, W, 3) f32.  (Per-channel conv biases of norm
    layers cancel exactly under InstanceNorm(affine=False) and are dropped.)"""
    cd, ad = compute_dtype, act_dtype

    # c_in: ReflectionPad2d(3) + Conv2d(3, ngf, 7) + IN + ReLU
    w, _ = params["c_in"]
    cin = w.shape[1]
    cin_pad = (-cin) % 8                      # align the contraction dim
    xp = _pad_reflect(x.astype(ad), 3)
    w_hwio = _conv_w_hwio(w)
    if cin_pad:
        xp = jnp.pad(xp, ((0, 0), (0, 0), (0, 0), (0, cin_pad)))
        w_hwio = jnp.pad(w_hwio, ((0, 0), (0, 0), (0, cin_pad), (0, 0)))
    y, st = fused_conv(xp, w_hwio, compute_dtype=cd, out_dtype=ad)
    # IN + ReLU + zero-pad(1) (the stride-2 down1 conv's padding), fused
    hpad = norm_pad_act(y, st, pad=1, mode="zero", act="relu", out_dtype=ad)

    # two stride-2 downsampling convs -> stride-1 K=2 via space-to-depth
    w1, _ = params["down1"]
    y, st = fused_conv(_s2d(hpad), _strided_conv_weight(w1),
                       compute_dtype=cd, out_dtype=ad)
    hpad = norm_pad_act(y, st, pad=1, mode="zero", act="relu", out_dtype=ad)

    w2, _ = params["down2"]
    y, st = fused_conv(_s2d(hpad), _strided_conv_weight(w2),
                       compute_dtype=cd, out_dtype=ad)
    # reflect pad 1: the first ResNet block's ReflectionPad2d(1), fused
    hpad = norm_pad_act(y, st, pad=1, mode="reflect", act="relu", out_dtype=ad)

    # 9 ResNet blocks: x + (pad|conv|IN|relu|pad|conv|IN)(x)
    nb = len(params["blocks"])
    for bi, ((wa, _), (wb, _)) in enumerate(params["blocks"]):
        y, st = fused_conv(hpad, _conv_w_hwio(wa), compute_dtype=cd, out_dtype=ad)
        tpad = norm_pad_act(y, st, pad=1, mode="reflect", act="relu", out_dtype=ad)
        y, st = fused_conv(tpad, _conv_w_hwio(wb), compute_dtype=cd, out_dtype=ad)
        if bi == nb - 1:
            # block-9 output feeds up1: high-side zero halo of the sub-pixel convT
            hpad = norm_pad_act(y, st, residual=hpad, res_pad=1,
                                pad=((0, 1), (0, 1)), mode="zero", act="none",
                                out_dtype=ad)
        else:
            hpad = norm_pad_act(y, st, residual=hpad, res_pad=1,
                                pad=1, mode="reflect", act="none", out_dtype=ad)

    # ConvTranspose2d(k=3,s=2,p=1,op=1) x2 -> 4-phase sub-pixel decomposition
    for li, name in enumerate(("up1", "up2")):
        w, _ = params[name]
        cout = w.shape[1]
        y, st = fused_conv(hpad, _convT_phase_weight(w),
                           compute_dtype=cd, out_dtype=ad)
        st = st.reshape(st.shape[0], 2, 4, cout).sum(axis=2)    # merge phase stats
        yd = _d2s(y)
        if li == 0:
            hpad = norm_pad_act(yd, st, pad=((0, 1), (0, 1)), mode="zero",
                                act="relu", out_dtype=ad)
        else:
            # ReflectionPad2d(3) of the final 7x7 conv, fused
            hpad = norm_pad_act(yd, st, pad=3, mode="reflect", act="relu",
                                out_dtype=ad)

    # c_out: Conv2d(ngf, 3, 7) + bias + Tanh (no norm); pad Cout 3 -> 128 for a
    # lane-dense store and slice back outside.
    w, b = params["c_out"]
    cout = w.shape[0]
    cout_pad = (-cout) % 128
    w_hwio = _conv_w_hwio(w)
    if cout_pad:
        w_hwio = jnp.pad(w_hwio, ((0, 0), (0, 0), (0, 0), (0, cout_pad)))
        b = jnp.pad(b, (0, cout_pad))
    y, _ = fused_conv(hpad, w_hwio, bias=b, act="tanh", emit_stats=False,
                      compute_dtype=cd, out_dtype=jnp.float32)
    return y[..., :cout]


# ----------------------------------------------------------------------------
# Pure-XLA reference generator (numerical self-check of the lowering)
# ----------------------------------------------------------------------------
def _ref_instance_norm(y):
    mean = jnp.mean(y, axis=(1, 2), keepdims=True)
    var = jnp.mean(jnp.square(y - mean), axis=(1, 2), keepdims=True)
    return (y - mean) * lax.rsqrt(var + EPS)


def _ref_conv(x, w_oihw, stride, pad, pad_mode):
    if pad > 0:
        if pad_mode == "reflect":
            x = _pad_reflect(x, pad)
        else:
            x = jnp.pad(x, ((0, 0), (pad, pad), (pad, pad), (0, 0)))
    return lax.conv_general_dilated(
        x, w_oihw, (stride, stride), padding="VALID",
        dimension_numbers=("NHWC", "OIHW", "NHWC"),
        precision=lax.Precision.HIGHEST)


def _ref_convT(x, w_iohw):
    w = jnp.transpose(w_iohw, (1, 0, 2, 3))[:, :, ::-1, ::-1]
    return lax.conv_general_dilated(
        x, w, (1, 1), padding=[(1, 2), (1, 2)], lhs_dilation=(2, 2),
        dimension_numbers=("NHWC", "OIHW", "NHWC"),
        precision=lax.Precision.HIGHEST)


def reference_generator(params, x):
    w, _ = params["c_in"]
    h = jax.nn.relu(_ref_instance_norm(_ref_conv(x, w, 1, 3, "reflect")))
    for name in ("down1", "down2"):
        w, _ = params[name]
        h = jax.nn.relu(_ref_instance_norm(_ref_conv(h, w, 2, 1, "zero")))
    for (w1, _), (w2, _) in params["blocks"]:
        t = jax.nn.relu(_ref_instance_norm(_ref_conv(h, w1, 1, 1, "reflect")))
        h = h + _ref_instance_norm(_ref_conv(t, w2, 1, 1, "reflect"))
    for name in ("up1", "up2"):
        w, _ = params[name]
        h = jax.nn.relu(_ref_instance_norm(_ref_convT(h, w)))
    w, b = params["c_out"]
    return jnp.tanh(_ref_conv(h, w, 1, 3, "reflect") + b)


# ----------------------------------------------------------------------------
# CycleGAN.forward: fake_B = G_A(real_A); [rec_A, fake_A] = G_B([fake_B, real_B]);
#                   rec_B = G_A(fake_A).  (CUDA-stream parallelism has no explicit
# equivalent; the two G_B applications are batched into one sweep instead.)
# ----------------------------------------------------------------------------
def cyclegan_forward(params_GA, params_GB, real_A_nchw, real_B_nchw,
                     compute_dtype=jnp.bfloat16):
    to_nhwc = lambda t: jnp.transpose(t, (0, 2, 3, 1))
    to_nchw = lambda t: jnp.transpose(t, (0, 3, 1, 2))
    real_A = to_nhwc(real_A_nchw)
    real_B = to_nhwc(real_B_nchw)
    N = real_A.shape[0]

    fake_B = resnet_generator(params_GA, real_A, compute_dtype=compute_dtype)
    gb_out = resnet_generator(params_GB,
                              jnp.concatenate([fake_B, real_B], axis=0),
                              compute_dtype=compute_dtype)
    rec_A, fake_A = gb_out[:N], gb_out[N:]
    rec_B = resnet_generator(params_GA, fake_A, compute_dtype=compute_dtype)
    return {
        "fake_B": to_nchw(fake_B),
        "rec_A": to_nchw(rec_A),
        "fake_A": to_nchw(fake_A),
        "rec_B": to_nchw(rec_B),
    }


# ----------------------------------------------------------------------------
# small f32 unit checks of the two kernels (cheap: 4 tiny Mosaic compiles)
# ----------------------------------------------------------------------------
def _selfcheck_kernels():
    key = jax.random.PRNGKey(42)
    k1, k2, k3, k4 = jax.random.split(key, 4)

    # fused_conv: exercises fold="all" (Cin=8) and fold="kw" (Cin=64) + stats.
    for cin in (8, 64):
        x = jax.random.normal(k1, (1, 10, 10, cin), jnp.float32)
        w = 0.1 * jax.random.normal(k2, (3, 3, cin, 16), jnp.float32)
        y, st = fused_conv(x, w, emit_stats=True,
                           compute_dtype=jnp.float32, out_dtype=jnp.float32)
        y_ref = lax.conv_general_dilated(
            x, jnp.transpose(w, (3, 2, 0, 1)), (1, 1), "VALID",
            dimension_numbers=("NHWC", "OIHW", "NHWC"),
            precision=lax.Precision.HIGHEST)
        sc = 1.0 + float(jnp.max(jnp.abs(y_ref)))
        assert float(jnp.max(jnp.abs(y - y_ref))) < 1e-2 * sc, "conv mismatch"
        st_ref = jnp.stack([jnp.sum(y_ref, axis=(1, 2)),
                            jnp.sum(y_ref * y_ref, axis=(1, 2))], axis=1)
        scs = 1.0 + float(jnp.max(jnp.abs(st_ref)))
        assert float(jnp.max(jnp.abs(st - st_ref))) < 1e-2 * scs, "stats mismatch"

    # norm_pad_act: reflect pad + residual, and asymmetric zero pad + ReLU.
    y = jax.random.normal(k3, (2, 8, 8, 16), jnp.float32)
    res = jax.random.normal(k4, (2, 10, 10, 16), jnp.float32)
    st = jnp.stack([jnp.sum(y, axis=(1, 2)), jnp.sum(y * y, axis=(1, 2))], axis=1)
    mean = jnp.mean(y, axis=(1, 2), keepdims=True)
    var = jnp.mean(y * y, axis=(1, 2), keepdims=True) - mean * mean
    xn = (y - mean) * lax.rsqrt(jnp.maximum(var, 0.0) + EPS)

    out = norm_pad_act(y, st, pad=1, mode="reflect", residual=res, res_pad=1,
                       act="none", out_dtype=jnp.float32)
    ref = jnp.pad(xn + res[:, 1:9, 1:9, :],
                  ((0, 0), (1, 1), (1, 1), (0, 0)), mode="reflect")
    assert float(jnp.max(jnp.abs(out - ref))) < 5e-4, "norm_pad(reflect) mismatch"

    out = norm_pad_act(y, st, pad=((0, 1), (0, 1)), mode="zero", act="relu",
                       out_dtype=jnp.float32)
    ref = jnp.pad(jnp.maximum(xn, 0.0), ((0, 0), (0, 1), (0, 1), (0, 0)))
    assert float(jnp.max(jnp.abs(out - ref))) < 5e-4, "norm_pad(zero) mismatch"


# ----------------------------------------------------------------------------
if __name__ == "__main__":
    _selfcheck_kernels()

    key = jax.random.PRNGKey(0)
    k_ga, k_gb, k_a, k_b = jax.random.split(key, 4)

    # Small shapes consistent with the module: input_nc = output_nc = 3, ngf = 64.
    N, C, H, W = 2, 3, 16, 16
    params_GA = init_resnet_generator(k_ga)   # netG_A: 3 -> 3
    params_GB = init_resnet_generator(k_gb)   # netG_B: 3 -> 3

    real_A = jax.random.normal(k_a, (N, C, H, W), jnp.float32)
    real_B = jax.random.normal(k_b, (N, C, H, W), jnp.float32)

    fwd = jax.jit(cyclegan_forward)
    out = jax.block_until_ready(fwd(params_GA, params_GB, real_A, real_B))

    for name in ("fake_B", "rec_A", "fake_A", "rec_B"):
        assert out[name].shape == (N, C, H, W), (name, out[name].shape)
        assert out[name].dtype == jnp.float32
        assert bool(jnp.all(jnp.isfinite(out[name])))
        assert float(jnp.max(jnp.abs(out[name]))) <= 1.0 + 1e-5   # tanh-bounded

    # End-to-end sanity check of the fused bf16 Pallas lowering against plain XLA
    # (loose tolerances: the generators run bf16; structural bugs give O(1) errors).
    ref_fake_B = jax.jit(reference_generator)(
        params_GA, jnp.transpose(real_A, (0, 2, 3, 1)))
    ref_fake_B = jnp.transpose(ref_fake_B, (0, 3, 1, 2))
    diff = jnp.abs(out["fake_B"] - ref_fake_B)
    err_max = float(jnp.max(diff))
    err_mean = float(jnp.mean(diff))
    assert err_mean < 0.06 and err_max < 0.5, (
        f"Pallas vs XLA reference mismatch: mean={err_mean}, max={err_max}")

    print("KERNEL_OK")
</pallas_src>

<mosaic_0001>
module attributes {stable_mosaic.version = 11 : i64} {
  func.func @kernel(%arg0: i32, %arg1: i32, %arg2: memref<1x10x10x8xf32, #tpu.memory_space<vmem>>, %arg3: memref<72x16xf32, #tpu.memory_space<vmem>>, %arg4: memref<1x4x8x16xf32, #tpu.memory_space<vmem>>, %arg5: memref<1x2x16xf32, #tpu.memory_space<vmem>>) attributes {dimension_semantics = [#tpu.dimension_semantics<parallel>, #tpu.dimension_semantics<arbitrary>], iteration_bounds = array<i64: 1, 2>, scalar_prefetch = 0 : i64, scratch_operands = 0 : i64, tpu.core_type = #tpu.core_type<tc>, window_params = [{transform_indices = @transform_0, window_bounds = array<i64: 1, 10, 10, 8>}, {pipeline_mode = #tpu.pipeline_mode<synchronous>, transform_indices = @transform_1, window_bounds = array<i64: 72, 16>}, {transform_indices = @transform_2, window_bounds = array<i64: 1, 4, 8, 16>}, {transform_indices = @transform_3, window_bounds = array<i64: 1, 2, 16>}]} {
    %c4_i32 = arith.constant 4 : i32
    %0 = arith.muli %arg1, %c4_i32 : i32
    %c0_i32 = arith.constant 0 : i32
    %1 = arith.addi %0, %c0_i32 : i32
    %c0 = arith.constant 0 : index
    %2 = arith.index_cast %1 : i32 to index
    %c0_0 = arith.constant 0 : index
    %c0_1 = arith.constant 0 : index
    %3 = vector.load %arg2[%c0, %2, %c0_0, %c0_1] : memref<1x10x10x8xf32, #tpu.memory_space<vmem>>, vector<1x4x10x8xf32>
    %4 = vector.shape_cast %3 : vector<1x4x10x8xf32> to vector<4x10x8xf32>
    %5 = vector.extract_strided_slice %4 {offsets = [0, 0, 0], sizes = [4, 8, 8], strides = [1, 1, 1]} : vector<4x10x8xf32> to vector<4x8x8xf32>
    %6 = vector.extract_strided_slice %4 {offsets = [0, 1, 0], sizes = [4, 8, 8], strides = [1, 1, 1]} : vector<4x10x8xf32> to vector<4x8x8xf32>
    %7 = vector.extract_strided_slice %4 {offsets = [0, 2, 0], sizes = [4, 8, 8], strides = [1, 1, 1]} : vector<4x10x8xf32> to vector<4x8x8xf32>
    %c1_i32 = arith.constant 1 : i32
    %8 = arith.addi %0, %c1_i32 : i32
    %c0_2 = arith.constant 0 : index
    %9 = arith.index_cast %8 : i32 to index
    %c0_3 = arith.constant 0 : index
    %c0_4 = arith.constant 0 : index
    %10 = vector.load %arg2[%c0_2, %9, %c0_3, %c0_4] : memref<1x10x10x8xf32, #tpu.memory_space<vmem>>, vector<1x4x10x8xf32>
    %11 = vector.shape_cast %10 : vector<1x4x10x8xf32> to vector<4x10x8xf32>
    %12 = vector.extract_strided_slice %11 {offsets = [0, 0, 0], sizes = [4, 8, 8], strides = [1, 1, 1]} : vector<4x10x8xf32> to vector<4x8x8xf32>
    %13 = vector.extract_strided_slice %11 {offsets = [0, 1, 0], sizes = [4, 8, 8], strides = [1, 1, 1]} : vector<4x10x8xf32> to vector<4x8x8xf32>
    %14 = vector.extract_strided_slice %11 {offsets = [0, 2, 0], sizes = [4, 8, 8], strides = [1, 1, 1]} : vector<4x10x8xf32> to vector<4x8x8xf32>
    %c2_i32 = arith.constant 2 : i32
    %15 = arith.addi %0, %c2_i32 : i32
    %c0_5 = arith.constant 0 : index
    %16 = arith.index_cast %15 : i32 to index
    %c0_6 = arith.constant 0 : index
    %c0_7 = arith.constant 0 : index
    %17 = vector.load %arg2[%c0_5, %16, %c0_6, %c0_7] : memref<1x10x10x8xf32, #tpu.memory_space<vmem>>, vector<1x4x10x8xf32>
    %18 = vector.shape_cast %17 : vector<1x4x10x8xf32> to vector<4x10x8xf32>
    %19 = vector.extract_strided_slice %18 {offsets = [0, 0, 0], sizes = [4, 8, 8], strides = [1, 1, 1]} : vector<4x10x8xf32> to vector<4x8x8xf32>
    %20 = vector.extract_strided_slice %18 {offsets = [0, 1, 0], sizes = [4, 8, 8], strides = [1, 1, 1]} : vector<4x10x8xf32> to vector<4x8x8xf32>
    %21 = vector.extract_strided_slice %18 {offsets = [0, 2, 0], sizes = [4, 8, 8], strides = [1, 1, 1]} : vector<4x10x8xf32> to vector<4x8x8xf32>
    %22 = tpu.concatenate %5, %6, %7, %12, %13, %14, %19, %20, %21 in 2 : vector<4x8x8xf32>, vector<4x8x8xf32>, vector<4x8x8xf32>, vector<4x8x8xf32>, vector<4x8x8xf32>, vector<4x8x8xf32>, vector<4x8x8xf32>, vector<4x8x8xf32>, vector<4x8x8xf32> -> vector<4x8x72xf32>
    %23 = vector.shape_cast %22 : vector<4x8x72xf32> to vector<32x72xf32>
    %c0_8 = arith.constant 0 : index
    %c0_9 = arith.constant 0 : index
    %24 = vector.load %arg3[%c0_8, %c0_9] : memref<72x16xf32, #tpu.memory_space<vmem>>, vector<72x16xf32>
    %cst = arith.constant dense<0.000000e+00> : vector<32x16xf32>
    %25 = tpu.matmul %23, %24, %cst {dimension_numbers = #tpu.dot_dimension_numbers<[1], [0], [0], [1], [0, 0, 1, 1], [], []>} : vector<32x72xf32>, vector<72x16xf32>, vector<32x16xf32> -> vector<32x16xf32>
    %26 = vector.shape_cast %25 : vector<32x16xf32> to vector<4x8x16xf32>
    %c0_10 = arith.constant 0 : index
    %c0_11 = arith.constant 0 : index
    %c0_12 = arith.constant 0 : index
    %c0_13 = arith.constant 0 : index
    %27 = vector.load %arg4[%c0_10, %c0_11, %c0_12, %c0_13] : memref<1x4x8x16xf32, #tpu.memory_space<vmem>>, vector<1x4x8x16xf32>
    %28 = vector.shape_cast %27 : vector<1x4x8x16xf32> to vector<4x8x16xf32>
    %29 = vector.shape_cast %26 : vector<4x8x16xf32> to vector<1x4x8x16xf32>
    tpu.vector_store %arg4[%c0_10, %c0_11, %c0_12, %c0_13], %29 {strides = array<i32>} : memref<1x4x8x16xf32, #tpu.memory_space<vmem>>, vector<1x4x8x16xf32>,
    %cst_14 = arith.constant dense<0.000000e+00> : vector<16xf32>
    %30 = vector.multi_reduction <add>, %25, %cst_14 [0] : vector<32x16xf32> to vector<16xf32>
    %31 = vector.shape_cast %30 : vector<16xf32> to vector<1x16xf32>
    %32 = arith.mulf %25, %25 : vector<32x16xf32>
    %cst_15 = arith.constant dense<0.000000e+00> : vector<16xf32>
    %33 = vector.multi_reduction <add>, %32, %cst_15 [0] : vector<32x16xf32> to vector<16xf32>
    %34 = vector.shape_cast %33 : vector<16xf32> to vector<1x16xf32>
    %c0_i32_16 = arith.constant 0 : i32
    %35 = arith.cmpi eq, %arg1, %c0_i32_16 : i32
    %36 = arith.extui %35 : i1 to i32
    %c0_i32_17 = arith.constant 0 : i32
    %37 = arith.cmpi ne, %36, %c0_i32_17 : i32
    scf.if %37 {
      %c0_20 = arith.constant 0 : index
      %c0_21 = arith.constant 0 : index
      %c0_22 = arith.constant 0 : index
      %41 = vector.load %arg5[%c0_20, %c0_21, %c0_22] : memref<1x2x16xf32, #tpu.memory_space<vmem>>, vector<1x1x16xf32>
      %42 = vector.shape_cast %41 : vector<1x1x16xf32> to vector<1x16xf32>
      %43 = vector.shape_cast %31 : vector<1x16xf32> to vector<1x1x16xf32>
      tpu.vector_store %arg5[%c0_20, %c0_21, %c0_22], %43 {strides = array<i32>} : memref<1x2x16xf32, #tpu.memory_space<vmem>>, vector<1x1x16xf32>,
      %c0_23 = arith.constant 0 : index
      %c1 = arith.constant 1 : index
      %c0_24 = arith.constant 0 : index
      %44 = vector.load %arg5[%c0_23, %c1, %c0_24] : memref<1x2x16xf32, #tpu.memory_space<vmem>>, vector<1x1x16xf32>
      %45 = vector.shape_cast %44 : vector<1x1x16xf32> to vector<1x16xf32>
      %46 = vector.shape_cast %34 : vector<1x16xf32> to vector<1x1x16xf32>
      tpu.vector_store %arg5[%c0_23, %c1, %c0_24], %46 {strides = array<i32>} : memref<1x2x16xf32, #tpu.memory_space<vmem>>, vector<1x1x16xf32>,
    } else {
    }
    %c0_i32_18 = arith.constant 0 : i32
    %38 = arith.cmpi sgt, %arg1, %c0_i32_18 : i32
    %39 = arith.extui %38 : i1 to i32
    %c0_i32_19 = arith.constant 0 : i32
    %40 = arith.cmpi ne, %39, %c0_i32_19 : i32
    scf.if %40 {
      %c0_20 = arith.constant 0 : index
      %c0_21 = arith.constant 0 : index
      %c0_22 = arith.constant 0 : index
      %41 = vector.load %arg5[%c0_20, %c0_21, %c0_22] : memref<1x2x16xf32, #tpu.memory_space<vmem>>, vector<1x1x16xf32>
      %42 = vector.shape_cast %41 : vector<1x1x16xf32> to vector<1x16xf32>
      %43 = arith.addf %42, %31 : vector<1x16xf32>
      %c0_23 = arith.constant 0 : index
      %c0_24 = arith.constant 0 : index
      %c0_25 = arith.constant 0 : index
      %44 = vector.load %arg5[%c0_23, %c0_24, %c0_25] : memref<1x2x16xf32, #tpu.memory_space<vmem>>, vector<1x1x16xf32>
      %45 = vector.shape_cast %44 : vector<1x1x16xf32> to vector<1x16xf32>
      %46 = vector.shape_cast %43 : vector<1x16xf32> to vector<1x1x16xf32>
      tpu.vector_store %arg5[%c0_23, %c0_24, %c0_25], %46 {strides = array<i32>} : memref<1x2x16xf32, #tpu.memory_space<vmem>>, vector<1x1x16xf32>,
      %c0_26 = arith.constant 0 : index
      %c1 = arith.constant 1 : index
      %c0_27 = arith.constant 0 : index
      %47 = vector.load %arg5[%c0_26, %c1, %c0_27] : memref<1x2x16xf32, #tpu.memory_space<vmem>>, vector<1x1x16xf32>
      %48 = vector.shape_cast %47 : vector<1x1x16xf32> to vector<1x16xf32>
      %49 = arith.addf %48, %34 : vector<1x16xf32>
      %c0_28 = arith.constant 0 : index
      %c1_29 = arith.constant 1 : index
      %c0_30 = arith.constant 0 : index
      %50 = vector.load %arg5[%c0_28, %c1_29, %c0_30] : memref<1x2x16xf32, #tpu.memory_space<vmem>>, vector<1x1x16xf32>
      %51 = vector.shape_cast %50 : vector<1x1x16xf32> to vector<1x16xf32>
      %52 = vector.shape_cast %49 : vector<1x16xf32> to vector<1x1x16xf32>
      tpu.vector_store %arg5[%c0_28, %c1_29, %c0_30], %52 {strides = array<i32>} : memref<1x2x16xf32, #tpu.memory_space<vmem>>, vector<1x1x16xf32>,
    } else {
    }
    return
  }
  func.func @transform_0(%arg0: i32, %arg1: i32) -> (i32, i32, i32, i32) {
    %c0_i32 = arith.constant 0 : i32
    %c0_i32_0 = arith.constant 0 : i32
    %c0_i32_1 = arith.constant 0 : i32
    %c0_i32_2 = arith.constant 0 : i32
    return %arg0, %c0_i32, %c0_i32_0, %c0_i32_1 : i32, i32, i32, i32
  }
  func.func @transform_1(%arg0: i32, %arg1: i32) -> (i32, i32) {
    %c0_i32 = arith.constant 0 : i32
    %c0_i32_0 = arith.constant 0 : i32
    %c0_i32_1 = arith.constant 0 : i32
    return %c0_i32, %c0_i32_0 : i32, i32
  }
  func.func @transform_2(%arg0: i32, %arg1: i32) -> (i32, i32, i32, i32) {
    %c0_i32 = arith.constant 0 : i32
    %c0_i32_0 = arith.constant 0 : i32
    %c0_i32_1 = arith.constant 0 : i32
    return %arg0, %arg1, %c0_i32, %c0_i32_0 : i32, i32, i32, i32
  }
  func.func @transform_3(%arg0: i32, %arg1: i32) -> (i32, i32, i32) {
    %c0_i32 = arith.constant 0 : i32
    %c0_i32_0 = arith.constant 0 : i32
    %c0_i32_1 = arith.constant 0 : i32
    return %arg0, %c0_i32, %c0_i32_0 : i32, i32, i32
  }
}

</mosaic_0001>

<llo_original>
// kernel: tpu_custom_call.1
$region0: #{tpu_custom_call.1}
  #allocation0 [shape = 'u32[]', space=smem, size = 0x4, offset = 0x4, fixed_abs, tag = 'smem constant byte address 0x4 - core index']
  #allocation1 [shape = 'u32[144,128]{1,0:T(1,128)}', space=vmem, size = 0x12000, scoped, tag = 'internal scratch']
  %s0 = inlined_call_operand.vmem [shape: f32[1,10,10,8], index: 0, kind: input, shape index: {}]
  %s1 = inlined_call_operand.vmem [shape: f32[72,16], index: 1, kind: input, shape index: {}]
  %s2 = inlined_call_operand.hbm [shape: f32[1,8,8,16], index: 2, kind: output, shape index: {0}]
  %s3 = inlined_call_operand.hbm [shape: f32[1,2,16], index: 3, kind: output, shape index: {1}]
  %4 = xla_tuple %s2, %s3
  %s5 = sld [smem:[#allocation0]]
  $region57: #{tpu_custom_call.1} parent=0
    _
  %s7 = ssub.s32 1, %s5
  %s8 = scalar_select 0, %s7, %s5
  $region1: #{tpu_custom_call.1} parent=0
    #allocation2 [shape = 'u8[32768]{0}', space=vmem, size = 0x8000, scoped, tag = 'output window, operand 0']
    #allocation3 [shape = 's32[2]{0}', space=sflag, size = 0x8, scoped, tag = 'scoped memory for tpu_custom_call.1']
    #allocation4 [shape = 'u8[1024]{0}', space=vmem, size = 0x400, scoped, tag = 'output window, operand 1, single buffered']
    #allocation5 [shape = 's32[1]{0}', space=sflag, size = 0x4, scoped, tag = 'scoped memory for tpu_custom_call.1']
    %9 = vsyncpa [#allocation3], 0
    %s10 = scalar_lea.sflag [#allocation3], 1
    %11 = vsyncpa %s10, 0
    %12 = vsyncpa [#allocation5], 0
    loop: start=0, step=1, limit=4
    $region2: #{tpu_custom_call.1} parent=1 // loop_pre_header
      _
    $region3: #{tpu_custom_call.1} parent=1 // loop_header
      %s14 = sphi 0, %s18
      %p15 = scmp.ge.s32.totalorder %s14, 4
      %s21 = sphi 0, %s33
      %s22 = sphi 0, %s29
      %s23 = sphi 0, %s21
      %s24 = sphi 0, %s22
      %s25 = sphi 0, %s23
      %s26 = sphi 0, %s24
      %s36 = sphi 0, %s38
      %s39 = sphi 0, %s36
      %s40 = sphi 0, %s39
      %s56 = sphi 0, %s40
      %s60 = sphi 0, %s60
      %s62 = sphi 0, %s60
      %s63 = sphi 0, %s62
      %s77 = sphi 0, %s63
      %s85 = sphi 0, %s87
      %s88 = sphi 0, %s85
      %s89 = sphi 0, %s88
      %s105 = sphi 0, %s89
      %s111 = sphi 0, %s113
      %s114 = sphi 0, %s111
      %s115 = sphi 0, %s114
      %s131 = sphi 0, %s115
    $region4: #{tpu_custom_call.1} parent=1 // loop_header_branch
      %17 = sbr.rel (%p15) target = $region8
    $region5: #{tpu_custom_call.1} parent=1 // loop_body
      %s19 = ssub.s32 %s14, 1
      %s20 = ssub.s32 %s14, 2
      %s27 = sadd.s32 1, %s22
      %p28 = scmp.ge.s32.totalorder %s27, 2
      %s29 = scalar_select %p28, 0, %s27
      %s30 = sadd.s32 1, %s21
      %s31 = scalar_select %p28, %s30, %s21
      %p32 = scmp.ge.s32.totalorder %s31, 1
      %s33 = scalar_select %p32, 0, %s31
      %s34 = ssub.s32 %s21, %s33
      %p35 = scmp.eq.s32.totalorder %s34, 0
      %s37 = sadd.s32 %s36, 1
      %s38 = scalar_select %p35, %s36, %s37
      %p41 = pneg %p35
      %p42 = scmp.eq.s32.totalorder %s14, 1
      %p43 = por %p41, %p42
      %p44 = scmp.ne.s32.totalorder %s36, %s39
      %p45 = scmp.eq.s32.totalorder %s14, 0
      %p46 = por %p44, %p45
      %p47 = scmp.ne.s32.totalorder %s36, %s39
      %p48 = scmp.eq.s32.totalorder %s19, 1
      %p49 = por %p47, %p48
      %p50 = scmp.ne.s32.totalorder %s39, %s40
      %p51 = scmp.eq.s32.totalorder %s19, 0
      %p52 = por %p50, %p51
      %p53 = scmp.ne.s32.totalorder %s39, %s40
      %p54 = scmp.eq.s32.totalorder %s20, 1
      %p55 = por %p53, %p54
      %p57 = scmp.ne.s32.totalorder %s40, %s56
      %p58 = scmp.eq.s32.totalorder %s20, 0
      %p59 = por %p57, %p58
      %s61 = sadd.s32 %s60, 1
      %p64 = scmp.eq.s32.totalorder %s14, 1
      %p65 = scmp.ne.s32.totalorder %s60, %s62
      %p66 = scmp.eq.s32.totalorder %s14, 0
      %p67 = por %p65, %p66
      %p68 = scmp.ne.s32.totalorder %s60, %s62
      %p69 = scmp.eq.s32.totalorder %s19, 1
      %p70 = por %p68, %p69
      %p71 = scmp.ne.s32.totalorder %s62, %s63
      %p72 = scmp.eq.s32.totalorder %s19, 0
      %p73 = por %p71, %p72
      %p74 = scmp.ne.s32.totalorder %s62, %s63
      %p75 = scmp.eq.s32.totalorder %s20, 1
      %p76 = por %p74, %p75
      %p78 = scmp.ne.s32.totalorder %s63, %s77
      %p79 = scmp.eq.s32.totalorder %s20, 0
      %p80 = por %p78, %p79
      %s81 = ssub.s32 %s21, %s33
      %s82 = ssub.s32 %s22, %s29
      %s83 = sor.u32 %s81, %s82
      %p84 = scmp.eq.s32.totalorder %s83, 0
      %s86 = sadd.s32 %s85, 1
      %s87 = scalar_select %p84, %s85, %s86
      %p90 = pneg %p84
      %p91 = scmp.eq.s32.totalorder %s14, 1
      %p92 = por %p90, %p91
      %p93 = scmp.ne.s32.totalorder %s85, %s88
      %p94 = scmp.eq.s32.totalorder %s14, 0
      %p95 = por %p93, %p94
      %p96 = scmp.ne.s32.totalorder %s85, %s88
      %p97 = scmp.eq.s32.totalorder %s19, 1
      %p98 = por %p96, %p97
      %p99 = scmp.ne.s32.totalorder %s88, %s89
      %p100 = scmp.eq.s32.totalorder %s19, 0
      %p101 = por %p99, %p100
      %p102 = scmp.ne.s32.totalorder %s88, %s89
      %p103 = scmp.eq.s32.totalorder %s20, 1
      %p104 = por %p102, %p103
      %p106 = scmp.ne.s32.totalorder %s89, %s105
      %p107 = scmp.eq.s32.totalorder %s20, 0
      %p108 = por %p106, %p107
      %s109 = ssub.s32 %s21, %s33
      %p110 = scmp.eq.s32.totalorder %s109, 0
      %s112 = sadd.s32 %s111, 1
      %s113 = scalar_select %p110, %s111, %s112
      %p116 = pneg %p110
      %p117 = scmp.eq.s32.totalorder %s14, 1
      %p118 = por %p116, %p117
      %p119 = scmp.ne.s32.totalorder %s111, %s114
      %p120 = scmp.eq.s32.totalorder %s14, 0
      %p121 = por %p119, %p120
      %p122 = scmp.ne.s32.totalorder %s111, %s114
      %p123 = scmp.eq.s32.totalorder %s19, 1
      %p124 = por %p122, %p123
      %p125 = scmp.ne.s32.totalorder %s114, %s115
      %p126 = scmp.eq.s32.totalorder %s19, 0
      %p127 = por %p125, %p126
      %p128 = scmp.ne.s32.totalorder %s114, %s115
      %p129 = scmp.eq.s32.totalorder %s20, 1
      %p130 = por %p128, %p129
      %p132 = scmp.ne.s32.totalorder %s115, %s131
      %p133 = scmp.eq.s32.totalorder %s20, 0
      %p134 = por %p132, %p133
      %p135 = scmp.le.s32.totalorder 1, %s14
      %p136 = scmp.lt.s32.totalorder %s14, 3
      %p137 = pnand %p135, %p136
      %p138 = pneg %p137
      // Predicated region
      $region9: #{tpu_custom_call.1} parent=5 // pred_check
        _
      $region10: #{tpu_custom_call.1} parent=5 // pred_check_branch
        %140 = sbr.rel (%p137) target = $region12
      $region11: #{tpu_custom_call.1} parent=5 // pred_region
        %s141 = ssub.s32 %s14, 1
        // Predicated region
        $region13: #{tpu_custom_call.1} parent=11 // pred_check
          %p142 = pneg %p52
        $region14: #{tpu_custom_call.1} parent=11 // pred_check_branch
          %144 = sbr.rel (%p142) target = $region16
        $region15: #{tpu_custom_call.1} parent=11 // pred_region
          %p145 = scmp.lt.s32.totalorder %s23, 0
          %s146 = scalar_select %p145, %s23, 0
          %s147 = smul.addr %s146, 20
          %s148 = smul.addr %s147, 8
          %s149 = scalar_lea.vmem %s0, %s148
        $region16: #{tpu_custom_call.1} parent=11 // pred_fallthru
          _
        // Predicated region
        $region17: #{tpu_custom_call.1} parent=11 // pred_check
          %p150 = pneg %p73
        $region18: #{tpu_custom_call.1} parent=11 // pred_check_branch
          %152 = sbr.rel (%p150) target = $region20
        $region19: #{tpu_custom_call.1} parent=11 // pred_region
          _
        $region20: #{tpu_custom_call.1} parent=11 // pred_fallthru
          _
      $region12: #{tpu_custom_call.1} parent=5 // pred_fallthru
        _
      %p153 = scmp.lt.s32.totalorder %s14, 2
      // Predicated region
      $region21: #{tpu_custom_call.1} parent=5 // pred_check
        %p154 = pneg %p153
      $region22: #{tpu_custom_call.1} parent=5 // pred_check_branch
        %156 = sbr.rel (%p154) target = $region24
      $region23: #{tpu_custom_call.1} parent=5 // pred_region
        _
      $region24: #{tpu_custom_call.1} parent=5 // pred_fallthru
        _
      %p157 = scmp.le.s32.totalorder 1, %s14
      %p158 = scmp.lt.s32.totalorder %s14, 3
      %p159 = pnand %p157, %p158
      %p160 = pneg %p159
      // Predicated region
      $region25: #{tpu_custom_call.1} parent=5 // pred_check
        _
      $region26: #{tpu_custom_call.1} parent=5 // pred_check_branch
        %162 = sbr.rel (%p159) target = $region28
      $region27: #{tpu_custom_call.1} parent=5 // pred_region
        %s163 = ssub.s32 %s14, 1
        %p164 = scmp.lt.s32.totalorder %s23, 0
        %s165 = scalar_select %p164, %s23, 0
        %s166 = smul.addr %s165, 20
        %s167 = smul.addr %s166, 8
        %s168 = scalar_lea.vmem %s0, %s167
        %p169 = pneg %p52
        %p170 = pneg %p49
        %p171 = pneg %p73
        %p172 = pneg %p70
        %p173 = pneg %p101
        %p174 = pneg %p98
        %s175 = sand.u32 %s88, 1
        %s176 = scalar_lea.sflag [#allocation3], %s175
        %s177 = sand.u32 %s88, 1
        %s178 = smul.addr %s177, 32
        %s179 = scalar_lea.vmem [#allocation2], %s178
        %p180 = pneg %p127
        %p181 = pneg %p124
        %p182 = scmp.lt.s32.totalorder %s23, 0
        %s183 = scalar_select %p182, %s23, 0
        %s184 = smul.addr %s183, 20
        %s185 = smul.addr %s184, 8
        %s186 = scalar_lea.vmem %s0, %s185
        %s187 = smul.u32 4, %s24
        %s188 = smul.u32 %s24, 4
        %s189 = smul.u32 %s188, 16
        %s190 = scalar_lea.vmem %s186, %s189
        %v191 = vld [vmem:[%s190] sm:$0xff]
        %v192 = vld [vmem:[%s190 + $0x8] sm:$0x3]
        %v193 = vld [vmem:[%s190 + $0x10] sm:$0xff]
        %v194 = vld [vmem:[%s190 + $0x18] sm:$0x3]
        %v195 = vld [vmem:[%s190 + $0x20] sm:$0xff]
        %v196 = vld [vmem:[%s190 + $0x28] sm:$0x3]
        %v197 = vld [vmem:[%s190 + $0x30] sm:$0xff]
        %v198 = vld [vmem:[%s190 + $0x38] sm:$0x3]
        %s199 = sadd.s32 %s188, 1
        %s200 = smul.u32 %s199, 16
        %s201 = scalar_lea.vmem %s186, %s200
        %v202 = vld [vmem:[%s201] sm:$0xff]
        %v203 = vld [vmem:[%s201 + $0x8] sm:$0x3]
        %v204 = vld [vmem:[%s201 + $0x10] sm:$0xff]
        %v205 = vld [vmem:[%s201 + $0x18] sm:$0x3]
        %v206 = vld [vmem:[%s201 + $0x20] sm:$0xff]
        %v207 = vld [vmem:[%s201 + $0x28] sm:$0x3]
        %v208 = vld [vmem:[%s201 + $0x30] sm:$0xff]
        %v209 = vld [vmem:[%s201 + $0x38] sm:$0x3]
        %s210 = sadd.s32 %s188, 2
        %s211 = smul.u32 %s210, 16
        %s212 = scalar_lea.vmem %s186, %s211
        %v213 = vld [vmem:[%s212] sm:$0xff]
        %v214 = vld [vmem:[%s212 + $0x8] sm:$0x3]
        %v215 = vld [vmem:[%s212 + $0x10] sm:$0xff]
        %v216 = vld [vmem:[%s212 + $0x18] sm:$0x3]
        %v217 = vld [vmem:[%s212 + $0x20] sm:$0xff]
        %v218 = vld [vmem:[%s212 + $0x28] sm:$0x3]
        %v219 = vld [vmem:[%s212 + $0x30] sm:$0xff]
        %v220 = vld [vmem:[%s212 + $0x38] sm:$0x3]
        %vm229 = vcmask 1046528
        %v230 = vrot.slane %v191, 1
        %v231 = vrot.slane %v192, 1
        %v232 = vsel %vm229, %v230, %v231
        %v233 = vrot.slane %v193, 1
        %v234 = vrot.slane %v194, 1
        %v235 = vsel %vm229, %v233, %v234
        %v236 = vrot.slane %v195, 1
        %v237 = vrot.slane %v196, 1
        %v238 = vsel %vm229, %v236, %v237
        %v239 = vrot.slane %v197, 1
        %v240 = vrot.slane %v198, 1
        %v241 = vsel %vm229, %v239, %v240
        %242 = vrot.lane.b32.xlu0 %v232, 8
        %v243 = vpop.permute.xlu0 %242
        %244 = vrot.lane.b32.xlu0 %v235, 8
        %v245 = vpop.permute.xlu0 %244
        %246 = vrot.lane.b32.xlu0 %v238, 8
        %v247 = vpop.permute.xlu0 %246
        %248 = vrot.lane.b32.xlu0 %v241, 8
        %v249 = vpop.permute.xlu0 %248
        %vm254 = vcmask 1045504
        %v255 = vrot.slane %v191, 2
        %v256 = vrot.slane %v192, 2
        %v257 = vsel %vm254, %v255, %v256
        %v258 = vrot.slane %v193, 2
        %v259 = vrot.slane %v194, 2
        %v260 = vsel %vm254, %v258, %v259
        %v261 = vrot.slane %v195, 2
        %v262 = vrot.slane %v196, 2
        %v263 = vsel %vm254, %v261, %v262
        %v264 = vrot.slane %v197, 2
        %v265 = vrot.slane %v198, 2
        %v266 = vsel %vm254, %v264, %v265
        %267 = vrot.lane.b32.xlu0 %v257, 16
        %v268 = vpop.permute.xlu0 %267
        %269 = vrot.lane.b32.xlu0 %v260, 16
        %v270 = vpop.permute.xlu0 %269
        %271 = vrot.lane.b32.xlu0 %v263, 16
        %v272 = vpop.permute.xlu0 %271
        %273 = vrot.lane.b32.xlu0 %v266, 16
        %v274 = vpop.permute.xlu0 %273
        %283 = vrot.lane.b32.xlu0 %v202, 24
        %v284 = vpop.permute.xlu0 %283
        %285 = vrot.lane.b32.xlu0 %v204, 24
        %v286 = vpop.permute.xlu0 %285
        %287 = vrot.lane.b32.xlu0 %v206, 24
        %v288 = vpop.permute.xlu0 %287
        %289 = vrot.lane.b32.xlu0 %v208, 24
        %v290 = vpop.permute.xlu0 %289
        %v299 = vrot.slane %v202, 1
        %v300 = vrot.slane %v203, 1
        %v301 = vsel %vm229, %v299, %v300
        %v302 = vrot.slane %v204, 1
        %v303 = vrot.slane %v205, 1
        %v304 = vsel %vm229, %v302, %v303
        %v305 = vrot.slane %v206, 1
        %v306 = vrot.slane %v207, 1
        %v307 = vsel %vm229, %v305, %v306
        %v308 = vrot.slane %v208, 1
        %v309 = vrot.slane %v209, 1
        %v310 = vsel %vm229, %v308, %v309
        %311 = vrot.lane.b32.xlu0 %v301, 32
        %v312 = vpop.permute.xlu0 %311
        %313 = vrot.lane.b32.xlu0 %v304, 32
        %v314 = vpop.permute.xlu0 %313
        %315 = vrot.lane.b32.xlu0 %v307, 32
        %v316 = vpop.permute.xlu0 %315
        %317 = vrot.lane.b32.xlu0 %v310, 32
        %v318 = vpop.permute.xlu0 %317
        %v323 = vrot.slane %v202, 2
        %v324 = vrot.slane %v203, 2
        %v325 = vsel %vm254, %v323, %v324
        %v326 = vrot.slane %v204, 2
        %v327 = vrot.slane %v205, 2
        %v328 = vsel %vm254, %v326, %v327
        %v329 = vrot.slane %v206, 2
        %v330 = vrot.slane %v207, 2
        %v331 = vsel %vm254, %v329, %v330
        %v332 = vrot.slane %v208, 2
        %v333 = vrot.slane %v209, 2
        %v334 = vsel %vm254, %v332, %v333
        %335 = vrot.lane.b32.xlu0 %v325, 40
        %v336 = vpop.permute.xlu0 %335
        %337 = vrot.lane.b32.xlu0 %v328, 40
        %v338 = vpop.permute.xlu0 %337
        %339 = vrot.lane.b32.xlu0 %v331, 40
        %v340 = vpop.permute.xlu0 %339
        %341 = vrot.lane.b32.xlu0 %v334, 40
        %v342 = vpop.permute.xlu0 %341
        %351 = vrot.lane.b32.xlu0 %v213, 48
        %v352 = vpop.permute.xlu0 %351
        %353 = vrot.lane.b32.xlu0 %v215, 48
        %v354 = vpop.permute.xlu0 %353
        %355 = vrot.lane.b32.xlu0 %v217, 48
        %v356 = vpop.permute.xlu0 %355
        %357 = vrot.lane.b32.xlu0 %v219, 48
        %v358 = vpop.permute.xlu0 %357
        %v367 = vrot.slane %v213, 1
        %v368 = vrot.slane %v214, 1
        %v369 = vsel %vm229, %v367, %v368
        %v370 = vrot.slane %v215, 1
        %v371 = vrot.slane %v216, 1
        %v372 = vsel %vm229, %v370, %v371
        %v373 = vrot.slane %v217, 1
        %v374 = vrot.slane %v218, 1
        %v375 = vsel %vm229, %v373, %v374
        %v376 = vrot.slane %v219, 1
        %v377 = vrot.slane %v220, 1
        %v378 = vsel %vm229, %v376, %v377
        %379 = vrot.lane.b32.xlu0 %v369, 56
        %v380 = vpop.permute.xlu0 %379
        %381 = vrot.lane.b32.xlu0 %v372, 56
        %v382 = vpop.permute.xlu0 %381
        %383 = vrot.lane.b32.xlu0 %v375, 56
        %v384 = vpop.permute.xlu0 %383
        %385 = vrot.lane.b32.xlu0 %v378, 56
        %v386 = vpop.permute.xlu0 %385
        %v391 = vrot.slane %v213, 2
        %v392 = vrot.slane %v214, 2
        %v393 = vsel %vm254, %v391, %v392
        %v394 = vrot.slane %v215, 2
        %v395 = vrot.slane %v216, 2
        %v396 = vsel %vm254, %v394, %v395
        %v397 = vrot.slane %v217, 2
        %v398 = vrot.slane %v218, 2
        %v399 = vsel %vm254, %v397, %v398
        %v400 = vrot.slane %v219, 2
        %v401 = vrot.slane %v220, 2
        %v402 = vsel %vm254, %v400, %v401
        %403 = vrot.lane.b32.xlu0 %v393, 64
        %v404 = vpop.permute.xlu0 %403
        %405 = vrot.lane.b32.xlu0 %v396, 64
        %v406 = vpop.permute.xlu0 %405
        %407 = vrot.lane.b32.xlu0 %v399, 64
        %v408 = vpop.permute.xlu0 %407
        %409 = vrot.lane.b32.xlu0 %v402, 64
        %v410 = vpop.permute.xlu0 %409
        %vm415 = vcmask 64512
        %v416 = vsel %vm415, %v191, %v243
        %v417 = vsel %vm415, %v193, %v245
        %v418 = vsel %vm415, %v195, %v247
        %v419 = vsel %vm415, %v197, %v249
        %vm420 = vcmask 130048
        %v421 = vsel %vm420, %v416, %v268
        %v422 = vsel %vm420, %v417, %v270
        %v423 = vsel %vm420, %v418, %v272
        %v424 = vsel %vm420, %v419, %v274
        %vm425 = vcmask 195584
        %v426 = vsel %vm425, %v421, %v284
        %v427 = vsel %vm425, %v422, %v286
        %v428 = vsel %vm425, %v423, %v288
        %v429 = vsel %vm425, %v424, %v290
        %vm430 = vcmask 261120
        %v431 = vsel %vm430, %v426, %v312
        %v432 = vsel %vm430, %v427, %v314
        %v433 = vsel %vm430, %v428, %v316
        %v434 = vsel %vm430, %v429, %v318
        %vm435 = vcmask 326656
        %v436 = vsel %vm435, %v431, %v336
        %v437 = vsel %vm435, %v432, %v338
        %v438 = vsel %vm435, %v433, %v340
        %v439 = vsel %vm435, %v434, %v342
        %vm440 = vcmask 392192
        %v441 = vsel %vm440, %v436, %v352
        %v442 = vsel %vm440, %v437, %v354
        %v443 = vsel %vm440, %v438, %v356
        %v444 = vsel %vm440, %v439, %v358
        %vm445 = vcmask 457728
        %v446 = vsel %vm445, %v441, %v380
        %v447 = vsel %vm445, %v442, %v382
        %v448 = vsel %vm445, %v443, %v384
        %v449 = vsel %vm445, %v444, %v386
        %vm450 = vcmask 523264
        %v451 = vsel %vm450, %v446, %v404
        %v452 = vsel %vm450, %v447, %v406
        %v453 = vsel %vm450, %v448, %v408
        %v454 = vsel %vm450, %v449, %v410
        %v455 = vld [vmem:[%s1] sm:$0xff]
        %v456 = vld [vmem:[%s1 + $0x8] sm:$0xff]
        %v457 = vld [vmem:[%s1 + $0x10] sm:$0xff]
        %v458 = vld [vmem:[%s1 + $0x18] sm:$0xff]
        %v459 = vld [vmem:[%s1 + $0x20] sm:$0xff]
        %v460 = vld [vmem:[%s1 + $0x28] sm:$0xff]
        %v461 = vld [vmem:[%s1 + $0x30] sm:$0xff]
        %v462 = vld [vmem:[%s1 + $0x38] sm:$0xff]
        %v463 = vld [vmem:[%s1 + $0x40] sm:$0xff]
        %vm464 = vcmask 588800
        %v466 = vsel %vm464, %v451, 0
        %v469 = vsel %vm464, %v452, 0
        %v472 = vsel %vm464, %v453, 0
        %v475 = vsel %vm464, %v454, 0
        %477 = vmatprep.subr.mxu0 0.0
        %478 = vmatpush1.msra.mxu0 %v455
        %479 = vmatprep.subr.mxu0 0.0
        %480 = vmatpush1.msra.mxu0 %v456
        %481 = vmatprep.subr.mxu0 0.0
        %482 = vmatpush1.msra.mxu0 %v457
        %483 = vmatprep.subr.mxu0 0.0
        %484 = vmatpush1.msra.mxu0 %v458
        %485 = vmatprep.subr.mxu0 0.0
        %486 = vmatpush1.msra.mxu0 %v459
        %487 = vmatprep.subr.mxu0 0.0
        %488 = vmatpush1.msra.mxu0 %v460
        %489 = vmatprep.subr.mxu0 0.0
        %490 = vmatpush1.msra.mxu0 %v461
        %491 = vmatprep.subr.mxu0 0.0
        %492 = vmatpush1.msra.mxu0 %v462
        %493 = vmatprep.subr.mxu0 0.0
        %494 = vmatpush1.msra.mxu0 %v463
        %495 = vmatprep.subr.mxu0 0.0
        %496 = vmatpush1.msra.mxu0 0.0
        %497 = vmatprep.subr.mxu0 0.0
        %498 = vmatpush1.msra.mxu0 0.0
        %499 = vmatprep.subr.mxu0 0.0
        %500 = vmatpush1.msra.mxu0 0.0
        %501 = vmatprep.subr.mxu0 0.0
        %502 = vmatpush1.msra.mxu0 0.0
        %503 = vmatprep.subr.mxu0 0.0
        %504 = vmatpush1.msra.mxu0 0.0
        %505 = vmatprep.subr.mxu0 0.0
        %506 = vmatpush1.msra.mxu0 0.0
        %507 = vmatprep.subr.mxu0 0.0
        %508 = vmatpush1.msra.mxu0 0.0
        %509 = vmatprep.subr.mxu0 0.0
        %510 = vmatpush1.msra.mxu0 0.0
        %511 = vmatprep.subr.mxu0 0.0
        %512 = vmatpush1.msra.mxu0 0.0
        %513 = vmatprep.subr.mxu0 0.0
        %514 = vmatpush1.msra.mxu0 0.0
        %515 = vmatprep.subr.mxu0 0.0
        %516 = vmatpush1.msra.mxu0 0.0
        %517 = vmatprep.subr.mxu0 0.0
        %518 = vmatpush1.msra.mxu0 0.0
        %519 = vmatprep.subr.mxu0 0.0
        %520 = vmatpush1.msra.mxu0 0.0
        %521 = vmatprep.subr.mxu0 0.0
        %522 = vmatpush1.msra.mxu0 0.0
        %523 = vmatprep.subr.mxu0 0.0
        %524 = vmatpush1.msra.mxu0 0.0
        %525 = vmatprep.subr.mxu0 0.0
        %526 = vmatpush1.msra.mxu0 0.0
        %527 = vmatprep.subr.mxu0 0.0
        %528 = vmatpush1.msra.mxu0 0.0
        %529 = vmatprep.subr.mxu0 0.0
        %530 = vmatpush1.msra.mxu0 0.0
        %531 = vmatprep.subr.mxu0 0.0
        %532 = vmatpush1.msra.mxu0 0.0
        %533 = vmatprep.subr.mxu0 0.0
        %534 = vmatpush1.msra.mxu0 0.0
        %535 = vmatprep.subr.mxu0 0.0
        %536 = vmatpush1.msra.mxu0 0.0
        %537 = vmatprep.subr.mxu0 0.0
        %538 = vmatpush1.msra.mxu0 0.0
        %539 = vmatprep.subr.mxu0 0.0
        %540 = vmatpush1.msra.mxu0 0.0
        %541 = vmatprep.mubr.f32.mxu0 0.0
        %542 = vmatmul.mubr.f32.gmra.mrb[0].mxu0 %v466
        %v543 = vpop.f32.mrb[0].mxu0
        %v544 = vadd.f32 0.0, %v543
        %v545 = vpop.f32.mrb[0].mxu0
        %546 = vmatprep.mubr.f32.mxu0 0.0
        %547 = vmatmul.mubr.f32.gmra.mrb[0].mxu0 %v469
        %v548 = vpop.f32.mrb[0].mxu0
        %v549 = vadd.f32 0.0, %v548
        %v550 = vpop.f32.mrb[0].mxu0
        %551 = vmatprep.mubr.f32.mxu0 0.0
        %552 = vmatmul.mubr.f32.gmra.mrb[0].mxu0 %v472
        %v553 = vpop.f32.mrb[0].mxu0
        %v554 = vadd.f32 0.0, %v553
        %v555 = vpop.f32.mrb[0].mxu0
        %556 = vmatprep.mubr.f32.mxu0 0.0
        %557 = vmatmul.mubr.f32.gmra.mrb[0].mxu0 %v475
        %v558 = vpop.f32.mrb[0].mxu0
        %v559 = vadd.f32 0.0, %v558
        %v560 = vpop.f32.mrb[0].mxu0
        %561 = vdwg.mxu0
        %562 = vst.msk [vmem:[%s179] sm:$0xff] %vm420, %v544
        %563 = vst.msk [vmem:[%s179 + $0x8] sm:$0xff] %vm420, %v549
        %564 = vst.msk [vmem:[%s179 + $0x10] sm:$0xff] %vm420, %v554
        %565 = vst.msk [vmem:[%s179 + $0x18] sm:$0xff] %vm420, %v559
        %v566 = vsel %vm420, %v544, 0.0
        %v567 = vsel %vm420, %v549, 0.0
        %v568 = vadd.f32 %v566, %v567
        %v569 = vsel %vm420, %v554, 0.0
        %v570 = vadd.f32 %v568, %v569
        %v571 = vsel %vm420, %v559, 0.0
        %v572 = vadd.f32 %v570, %v571
        %v573 = vrot.slane %v572, 4
        %v574 = vadd.f32 %v572, %v573
        %v575 = vrot.slane %v574, 2
        %v576 = vadd.f32 %v574, %v575
        %v577 = vrot.slane %v576, 1
        %v578 = vadd.f32 %v576, %v577
        %v579 = vmul.f32 %v544, %v544
        %v580 = vmul.f32 %v549, %v549
        %v581 = vmul.f32 %v554, %v554
        %v582 = vmul.f32 %v559, %v559
        %v583 = vsel %vm420, %v579, 0.0
        %v584 = vsel %vm420, %v580, 0.0
        %v585 = vadd.f32 %v583, %v584
        %v586 = vsel %vm420, %v581, 0.0
        %v587 = vadd.f32 %v585, %v586
        %v588 = vsel %vm420, %v582, 0.0
        %v589 = vadd.f32 %v587, %v588
        %v590 = vrot.slane %v589, 4
        %v591 = vadd.f32 %v589, %v590
        %v592 = vrot.slane %v591, 2
        %v593 = vadd.f32 %v591, %v592
        %v594 = vrot.slane %v593, 1
        %v595 = vadd.f32 %v593, %v594
        %p596 = scmp.eq.s32.totalorder %s24, 0
        // Predicated region
        $region29: #{tpu_custom_call.1} parent=27 // pred_check
          %p597 = pneg %p596
        $region30: #{tpu_custom_call.1} parent=27 // pred_check_branch
          %599 = sbr.rel (%p597) target = $region32
        $region31: #{tpu_custom_call.1} parent=27 // pred_region
          %vm600 = vcmask 122880
          %601 = vst.msk [vmem:[#allocation4] sm:$0x1] %vm600, %v578
          %602 = vst.msk [vmem:[#allocation4 + $0x1] sm:$0x1] %vm600, %v595
        $region32: #{tpu_custom_call.1} parent=27 // pred_fallthru
          _
        %p603 = scmp.gt.s32.totalorder %s24, 0
        // Predicated region
        $region33: #{tpu_custom_call.1} parent=27 // pred_check
          %p604 = pneg %p603
        $region34: #{tpu_custom_call.1} parent=27 // pred_check_branch
          %606 = sbr.rel (%p604) target = $region36
        $region35: #{tpu_custom_call.1} parent=27 // pred_region
          %v607 = vld [vmem:[#allocation4] sm:$0x1]
          %v608 = vadd.f32 %v607, %v578
          %vm609 = vcmask 122880
          %610 = vst.msk [vmem:[#allocation4] sm:$0x1] %vm609, %v608
          %v611 = vld [vmem:[#allocation4 + $0x1] sm:$0x1]
          %v612 = vadd.f32 %v611, %v595
          %613 = vst.msk [vmem:[#allocation4 + $0x1] sm:$0x1] %vm609, %v612
        $region36: #{tpu_custom_call.1} parent=27 // pred_fallthru
          _
        %s614 = sand.u32 %s88, 1
        %s615 = scalar_lea.sflag [#allocation3], %s614
        %s616 = sand.u32 %s88, 1
        %s617 = smul.addr %s616, 32
        %s618 = scalar_lea.vmem [#allocation2], %s617
        // Predicated region
        $region37: #{tpu_custom_call.1} parent=27 // pred_check
          %p619 = pneg %p98
        $region38: #{tpu_custom_call.1} parent=27 // pred_check_branch
          %621 = sbr.rel (%p619) target = $region40
        $region39: #{tpu_custom_call.1} parent=27 // pred_region
          %s622 = smul.u32 4, %s24
          %s624 = ssub.s32 512, 512
          %625 = vsyncadd %s615, %s624
          %s626 = smul.addr %s23, 8
          %s627 = sadd.s32 %s622, %s626
          %s628 = smul.addr %s627, 128
          %s629 = scalar_lea.hbm %s2, %s628
          %s630 = sshll.u32 %s618, 4
          %s631 = int_to_ptr.vmem [resolvable:$true] %s630
          %636 = dma.vmem_to_hbm [thread:$0]  %s631, 512, %s629, %s615, 128, 128, 8
        $region40: #{tpu_custom_call.1} parent=27 // pred_fallthru
          _
        // Predicated region
        $region41: #{tpu_custom_call.1} parent=27 // pred_check
          %p637 = pneg %p124
        $region42: #{tpu_custom_call.1} parent=27 // pred_check_branch
          %639 = sbr.rel (%p637) target = $region44
        $region43: #{tpu_custom_call.1} parent=27 // pred_region
          %s641 = ssub.s32 32, 32
          %642 = vsyncadd [#allocation5], %s641
          %s643 = smul.addr %s23, 32
          %s644 = scalar_lea.hbm %s3, %s643
          %s646 = sshll.u32 [#allocation4], 4
          %s647 = int_to_ptr.vmem [resolvable:$true] %s646
          %649 = dma.vmem_to_hbm [thread:$0]  %s647, 32, %s644, [#allocation5]
        $region44: #{tpu_custom_call.1} parent=27 // pred_fallthru
          _
        // Predicated region
        $region45: #{tpu_custom_call.1} parent=27 // pred_check
          %p650 = pneg %p124
        $region46: #{tpu_custom_call.1} parent=27 // pred_check_branch
          %652 = sbr.rel (%p650) target = $region48
        $region47: #{tpu_custom_call.1} parent=27 // pred_region
          %653 = dma.done [#allocation5], 32
        $region48: #{tpu_custom_call.1} parent=27 // pred_fallthru
          _
      $region28: #{tpu_custom_call.1} parent=5 // pred_fallthru
        _
      %p654 = scmp.le.s32.totalorder 2, %s14
      // Predicated region
      $region49: #{tpu_custom_call.1} parent=5 // pred_check
        %p655 = pneg %p654
      $region50: #{tpu_custom_call.1} parent=5 // pred_check_branch
        %657 = sbr.rel (%p655) target = $region52
      $region51: #{tpu_custom_call.1} parent=5 // pred_region
        %s658 = ssub.s32 %s14, 2
        // Predicated region
        $region53: #{tpu_custom_call.1} parent=51 // pred_check
          %p659 = pneg %p104
        $region54: #{tpu_custom_call.1} parent=51 // pred_check_branch
          %661 = sbr.rel (%p659) target = $region56
        $region55: #{tpu_custom_call.1} parent=51 // pred_region
          %s662 = sand.u32 %s89, 1
          %s663 = scalar_lea.sflag [#allocation3], %s662
          %s664 = sand.u32 %s89, 1
          %s665 = smul.addr %s664, 32
          %s666 = scalar_lea.vmem [#allocation2], %s665
          %667 = dma.done %s663, 512
        $region56: #{tpu_custom_call.1} parent=51 // pred_fallthru
          _
      $region52: #{tpu_custom_call.1} parent=5 // pred_fallthru
        _
    $region6: #{tpu_custom_call.1} parent=1 // loop_footer
      %s18 = sadd.s32 1, %s14
    $region7: #{tpu_custom_call.1} parent=1 // loop_footer_branch
      %13 = sbr.rel target = $region3
    $region8: #{tpu_custom_call.1} parent=1 // loop_exit
      _
    %668 = vsyncpa [#allocation3], 1
    %s669 = scalar_lea.sflag [#allocation3], 1
    %670 = vsyncpa %s669, 1
    %671 = vsyncpa [#allocation5], 1

</llo_original>
